<compile_context>
chip_gen: v5e
topology: v5e:2x2
jax: 0.10.0
libtpu: 0.0.40
codegen_flags: <defaults>
</compile_context>

<pallas_src>
import functools

import jax
import jax.numpy as jnp
from jax.experimental import pallas as pl
from jax.experimental.pallas import tpu as pltpu

_LANE = 128      # f32 lane width (last dim)
_SUBLANE = 8     # f32 sublane width (second-to-last dim)


def _round_up(x, m):
    return ((x + m - 1) // m) * m


def _pad2(a, rows, cols):
    r, c = a.shape
    if (r, c) == (rows, cols):
        return a
    return jnp.pad(a, ((0, rows - r), (0, cols - c)))


def prepare_params(params, *, compute_dtype=jnp.float32):
    """One-time weight preparation (hoisted out of the forward path).

    Pads to hardware tiles, transposes to the feature-major layout the kernel
    uses, and casts the MXU operands to `compute_dtype` (bf16 is valid and
    mildly beneficial on v5e as well as v6e/v7x).  Call once at init / after
    each optimizer step, not per forward call.
    """
    w1, b1, w2, b2, w3, b3 = (params[k] for k in ("w1", "b1", "w2", "b2", "w3", "b3"))
    in_dim, hidden = w1.shape
    out_dim = w3.shape[1]

    use_vpu_fc1 = in_dim <= _SUBLANE
    # On the tiny-K VPU path fc1 math stays f32 (no wasted bf16 round trips).
    w1_dtype = jnp.float32 if use_vpu_fc1 else compute_dtype

    in_pad = _SUBLANE if w1_dtype == jnp.float32 else 16   # bf16 sublane packing
    in_p = _round_up(in_dim, in_pad)
    hid_p = _round_up(hidden, _LANE)
    out_p = _round_up(out_dim, _SUBLANE)    # sublane axis of the transposed output

    return {
        # Transposed weights: y_T = W_T @ x_T.
        "w1t": _pad2(w1.T, hid_p, in_p).astype(w1_dtype),
        "w2t": _pad2(w2.T, hid_p, hid_p).astype(compute_dtype),
        "w3t": _pad2(w3.T, out_p, hid_p).astype(compute_dtype),
        # Biases as column vectors (broadcast along the batch/lane axis); f32.
        "b1t": _pad2(b1.reshape(-1, 1), hid_p, 1).astype(jnp.float32),
        "b2t": _pad2(b2.reshape(-1, 1), hid_p, 1).astype(jnp.float32),
        "b3t": _pad2(b3.reshape(-1, 1), out_p, 1).astype(jnp.float32),
    }


def _make_kernel(k_in, use_vpu_fc1):
    """Fused 3-layer MLP kernel in feature-major layout. k_in = real input dim."""

    def kernel(x_ref, w1_ref, b1_ref, w2_ref, b2_ref, w3_ref, b3_ref, o_ref):
        # ---- fc1: h1_T = W1_T @ x_T ----
        if use_vpu_fc1:
            # K is tiny (2 for MountainCar): a full MXU pass would be <2%
            # utilized, so build h1 as k_in rank-1 broadcast FMAs on the VPU.
            # Operands are f32 here (v5e-safe, no bf16 rounding).
            h1 = w1_ref[:, 0:1] * x_ref[0:1, :]
            for k in range(1, k_in):
                h1 = h1 + w1_ref[:, k:k + 1] * x_ref[k:k + 1, :]
        else:
            h1 = jnp.dot(w1_ref[...], x_ref[...],
                         preferred_element_type=jnp.float32)
        h1 = jnp.maximum(h1 + b1_ref[...], 0.0)           # bias + ReLU in f32

        # ---- fc2 ----
        h2 = jnp.dot(w2_ref[...], h1.astype(w2_ref.dtype),
                     preferred_element_type=jnp.float32)
        h2 = jnp.maximum(h2 + b2_ref[...], 0.0)

        # ---- fc3 (no activation) ----
        out = jnp.dot(w3_ref[...], h2.astype(w3_ref.dtype),
                      preferred_element_type=jnp.float32)
        o_ref[...] = (out + b3_ref[...]).astype(o_ref.dtype)

    return kernel


def qnetwork_forward(x, prep, *, in_dim, out_dim, block_b=512):
    """Fused QNetwork forward.

    x: (B, in_dim) float32.  prep: output of `prepare_params`.
    Returns (B, out_dim) float32.
    """
    assert x.shape[1] == in_dim, "x feature dim must match prepared params"
    B = x.shape[0]
    w1t, b1t, w2t, b2t, w3t, b3t = (
        prep[k] for k in ("w1t", "b1t", "w2t", "b2t", "w3t", "b3t"))
    hid_p, in_p = w1t.shape
    out_p = w3t.shape[0]
    use_vpu_fc1 = in_dim <= _SUBLANE

    # Batch tiling.  Batch lives on the lane axis (feature-major layout), so
    # tiles are 128-granular whenever the grid has more than one step; the
    # number of steps is kept even so v7x's 2 TensorCores split evenly.
    n_blocks = max(1, pl.cdiv(B, block_b))
    if n_blocks > 1 and n_blocks % 2:
        n_blocks += 1
    if n_blocks == 1:
        tb = _round_up(B, _SUBLANE)
    else:
        tb = _round_up(pl.cdiv(B, n_blocks), _LANE)
    b_p = n_blocks * tb

    # Transposed, zero-padded input: (in_p, b_p).  x stays f32 on the VPU-fc1
    # path (w1t.dtype == f32 there); otherwise it matches the MXU compute dtype.
    x_t = _pad2(x.T.astype(w1t.dtype), in_p, b_p)

    kernel = _make_kernel(k_in=in_dim, use_vpu_fc1=use_vpu_fc1)

    def batch_spec(shape):      # tiled along the batch (lane) grid axis
        return pl.BlockSpec(shape, lambda i: (0, i))

    def const_spec(shape):      # same block every step -> VMEM-resident, no re-DMA
        return pl.BlockSpec(shape, lambda i: (0, 0))

    out_t = pl.pallas_call(
        kernel,
        out_shape=jax.ShapeDtypeStruct((out_p, b_p), jnp.float32),
        grid=(n_blocks,),
        in_specs=[
            batch_spec((in_p, tb)),
            const_spec((hid_p, in_p)),
            const_spec((hid_p, 1)),
            const_spec((hid_p, hid_p)),
            const_spec((hid_p, 1)),
            const_spec((out_p, hid_p)),
            const_spec((out_p, 1)),
        ],
        out_specs=batch_spec((out_p, tb)),
        compiler_params=pltpu.CompilerParams(
            dimension_semantics=("parallel",)),
    )(x_t, w1t, b1t, w2t, b2t, w3t, b3t)

    # (out_p, b_p) -> (B, out_dim); under jit this fuses into one tiny copy.
    return out_t[:out_dim, :B].T


def init_params(key, input_dim, output_dim, hidden_dim):
    """nn.Linear-default init: U(-1/sqrt(fan_in), 1/sqrt(fan_in))."""
    keys = jax.random.split(key, 6)

    def linear(kw, kb, fan_in, fan_out):
        bound = 1.0 / jnp.sqrt(jnp.float32(fan_in))
        w = jax.random.uniform(kw, (fan_in, fan_out), jnp.float32, -bound, bound)
        b = jax.random.uniform(kb, (1, fan_out), jnp.float32, -bound, bound)
        return w, b

    w1, b1 = linear(keys[0], keys[1], input_dim, hidden_dim)
    w2, b2 = linear(keys[2], keys[3], hidden_dim, hidden_dim)
    w3, b3 = linear(keys[4], keys[5], hidden_dim, output_dim)
    return {"w1": w1, "b1": b1, "w2": w2, "b2": b2, "w3": w3, "b3": b3}


def reference_forward(x, p):
    h1 = jnp.maximum(x @ p["w1"] + p["b1"], 0.0)
    h2 = jnp.maximum(h1 @ p["w2"] + p["b2"], 0.0)
    return h2 @ p["w3"] + p["b3"]


if __name__ == "__main__":
    # MountainCar-v0: observation dim = 2, actions = 3; small hidden layer.
    batch, input_dim, output_dim, hidden_dim = 8, 2, 3, 32

    key = jax.random.PRNGKey(0)
    k_x, k_p = jax.random.split(key)
    x = jax.random.normal(k_x, (batch, input_dim), jnp.float32)
    params = init_params(k_p, input_dim, output_dim, hidden_dim)
    ref = reference_forward(x, params)

    # One-time weight prep (hoisted out of the per-step forward path).
    prep_f32 = prepare_params(params)
    fwd = jax.jit(functools.partial(qnetwork_forward,
                                    in_dim=input_dim, out_dim=output_dim))

    # f32 path (tolerance covers MXU default-precision rounding differences).
    out = jax.block_until_ready(fwd(x, prep_f32))
    assert out.shape == (batch, output_dim)
    assert jnp.allclose(out, ref, atol=2e-2, rtol=2e-2), "f32 mismatch vs reference"

    # bf16 MXU path (fc1 stays f32 on the VPU); valid on v5e/v6e/v7x.
    prep_bf16 = prepare_params(params, compute_dtype=jnp.bfloat16)
    out_bf16 = jax.block_until_ready(fwd(x, prep_bf16))
    assert out_bf16.shape == (batch, output_dim)
    assert jnp.allclose(out_bf16, ref, atol=1e-1, rtol=1e-1), "bf16 mismatch vs reference"

    # Larger batch exercising the pipelined batch grid (B=1500, block_b=512 ->
    # 4 even grid steps of 384 lanes; weights stay VMEM-resident across steps).
    big_b = 1500
    xb = jax.random.normal(jax.random.PRNGKey(1), (big_b, input_dim), jnp.float32)
    fwd_big = jax.jit(functools.partial(qnetwork_forward, in_dim=input_dim,
                                        out_dim=output_dim, block_b=512))
    out_big = jax.block_until_ready(fwd_big(xb, prep_f32))
    assert out_big.shape == (big_b, output_dim)
    assert jnp.allclose(out_big, reference_forward(xb, params),
                        atol=2e-2, rtol=2e-2), "batched mismatch vs reference"

    print("KERNEL_OK")
</pallas_src>

<mosaic_0001>
module attributes {stable_mosaic.version = 11 : i64} {
  func.func @kernel(%arg0: i32, %arg1: memref<8x8xf32, #tpu.memory_space<vmem>>, %arg2: memref<128x8xf32, #tpu.memory_space<vmem>>, %arg3: memref<128x1xf32, #tpu.memory_space<vmem>>, %arg4: memref<128x128xf32, #tpu.memory_space<vmem>>, %arg5: memref<128x1xf32, #tpu.memory_space<vmem>>, %arg6: memref<8x128xf32, #tpu.memory_space<vmem>>, %arg7: memref<8x1xf32, #tpu.memory_space<vmem>>, %arg8: memref<8x8xf32, #tpu.memory_space<vmem>>) attributes {dimension_semantics = [#tpu.dimension_semantics<parallel>], iteration_bounds = array<i64: 1>, scalar_prefetch = 0 : i64, scratch_operands = 0 : i64, tpu.core_type = #tpu.core_type<tc>, window_params = [{transform_indices = @transform_0, window_bounds = array<i64: 8, 8>}, {pipeline_mode = #tpu.pipeline_mode<synchronous>, transform_indices = @transform_1, window_bounds = array<i64: 128, 8>}, {pipeline_mode = #tpu.pipeline_mode<synchronous>, transform_indices = @transform_2, window_bounds = array<i64: 128, 1>}, {pipeline_mode = #tpu.pipeline_mode<synchronous>, transform_indices = @transform_3, window_bounds = array<i64: 128, 128>}, {pipeline_mode = #tpu.pipeline_mode<synchronous>, transform_indices = @transform_4, window_bounds = array<i64: 128, 1>}, {pipeline_mode = #tpu.pipeline_mode<synchronous>, transform_indices = @transform_5, window_bounds = array<i64: 8, 128>}, {pipeline_mode = #tpu.pipeline_mode<synchronous>, transform_indices = @transform_6, window_bounds = array<i64: 8, 1>}, {transform_indices = @transform_7, window_bounds = array<i64: 8, 8>}]} {
    %c0 = arith.constant 0 : index
    %c0_0 = arith.constant 0 : index
    %0 = vector.load %arg2[%c0, %c0_0] : memref<128x8xf32, #tpu.memory_space<vmem>>, vector<128x1xf32>
    %c0_1 = arith.constant 0 : index
    %c0_2 = arith.constant 0 : index
    %1 = vector.load %arg1[%c0_1, %c0_2] : memref<8x8xf32, #tpu.memory_space<vmem>>, vector<1x8xf32>
    %2 = vector.broadcast %0 : vector<128x1xf32> to vector<128x8xf32>
    %3 = vector.broadcast %1 : vector<1x8xf32> to vector<128x8xf32>
    %4 = arith.mulf %2, %3 : vector<128x8xf32>
    %c0_3 = arith.constant 0 : index
    %c1 = arith.constant 1 : index
    %5 = vector.load %arg2[%c0_3, %c1] : memref<128x8xf32, #tpu.memory_space<vmem>>, vector<128x1xf32>
    %c1_4 = arith.constant 1 : index
    %c0_5 = arith.constant 0 : index
    %6 = vector.load %arg1[%c1_4, %c0_5] : memref<8x8xf32, #tpu.memory_space<vmem>>, vector<1x8xf32>
    %7 = vector.broadcast %5 : vector<128x1xf32> to vector<128x8xf32>
    %8 = vector.broadcast %6 : vector<1x8xf32> to vector<128x8xf32>
    %9 = arith.mulf %7, %8 : vector<128x8xf32>
    %10 = arith.addf %4, %9 : vector<128x8xf32>
    %c0_6 = arith.constant 0 : index
    %c0_7 = arith.constant 0 : index
    %11 = vector.load %arg3[%c0_6, %c0_7] : memref<128x1xf32, #tpu.memory_space<vmem>>, vector<128x1xf32>
    %12 = vector.broadcast %11 : vector<128x1xf32> to vector<128x8xf32>
    %13 = arith.addf %10, %12 : vector<128x8xf32>
    %cst = arith.constant 0.000000e+00 : f32
    %14 = vector.broadcast %cst : f32 to vector<128x8xf32>
    %15 = arith.maximumf %13, %14 : vector<128x8xf32>
    %c0_8 = arith.constant 0 : index
    %c0_9 = arith.constant 0 : index
    %16 = vector.load %arg4[%c0_8, %c0_9] : memref<128x128xf32, #tpu.memory_space<vmem>>, vector<128x128xf32>
    %cst_10 = arith.constant dense<0.000000e+00> : vector<128x8xf32>
    %17 = tpu.matmul %16, %15, %cst_10 {dimension_numbers = #tpu.dot_dimension_numbers<[1], [0], [0], [1], [0, 0, 1, 1], [], []>} : vector<128x128xf32>, vector<128x8xf32>, vector<128x8xf32> -> vector<128x8xf32>
    %c0_11 = arith.constant 0 : index
    %c0_12 = arith.constant 0 : index
    %18 = vector.load %arg5[%c0_11, %c0_12] : memref<128x1xf32, #tpu.memory_space<vmem>>, vector<128x1xf32>
    %19 = vector.broadcast %18 : vector<128x1xf32> to vector<128x8xf32>
    %20 = arith.addf %17, %19 : vector<128x8xf32>
    %cst_13 = arith.constant 0.000000e+00 : f32
    %21 = vector.broadcast %cst_13 : f32 to vector<128x8xf32>
    %22 = arith.maximumf %20, %21 : vector<128x8xf32>
    %c0_14 = arith.constant 0 : index
    %c0_15 = arith.constant 0 : index
    %23 = vector.load %arg6[%c0_14, %c0_15] : memref<8x128xf32, #tpu.memory_space<vmem>>, vector<8x128xf32>
    %cst_16 = arith.constant dense<0.000000e+00> : vector<8x8xf32>
    %24 = tpu.matmul %23, %22, %cst_16 {dimension_numbers = #tpu.dot_dimension_numbers<[1], [0], [0], [1], [0, 0, 1, 1], [], []>} : vector<8x128xf32>, vector<128x8xf32>, vector<8x8xf32> -> vector<8x8xf32>
    %c0_17 = arith.constant 0 : index
    %c0_18 = arith.constant 0 : index
    %25 = vector.load %arg7[%c0_17, %c0_18] : memref<8x1xf32, #tpu.memory_space<vmem>>, vector<8x1xf32>
    %26 = vector.broadcast %25 : vector<8x1xf32> to vector<8x8xf32>
    %27 = arith.addf %24, %26 : vector<8x8xf32>
    %c0_19 = arith.constant 0 : index
    %c0_20 = arith.constant 0 : index
    %28 = vector.load %arg8[%c0_19, %c0_20] : memref<8x8xf32, #tpu.memory_space<vmem>>, vector<8x8xf32>
    tpu.vector_store %arg8[%c0_19, %c0_20], %27 {strides = array<i32>} : memref<8x8xf32, #tpu.memory_space<vmem>>, vector<8x8xf32>,
    return
  }
  func.func @transform_0(%arg0: i32) -> (i32, i32) {
    %c0_i32 = arith.constant 0 : i32
    %c0_i32_0 = arith.constant 0 : i32
    return %c0_i32, %arg0 : i32, i32
  }
  func.func @transform_1(%arg0: i32) -> (i32, i32) {
    %c0_i32 = arith.constant 0 : i32
    %c0_i32_0 = arith.constant 0 : i32
    %c0_i32_1 = arith.constant 0 : i32
    return %c0_i32, %c0_i32_0 : i32, i32
  }
  func.func @transform_2(%arg0: i32) -> (i32, i32) {
    %c0_i32 = arith.constant 0 : i32
    %c0_i32_0 = arith.constant 0 : i32
    %c0_i32_1 = arith.constant 0 : i32
    return %c0_i32, %c0_i32_0 : i32, i32
  }
  func.func @transform_3(%arg0: i32) -> (i32, i32) {
    %c0_i32 = arith.constant 0 : i32
    %c0_i32_0 = arith.constant 0 : i32
    %c0_i32_1 = arith.constant 0 : i32
    return %c0_i32, %c0_i32_0 : i32, i32
  }
  func.func @transform_4(%arg0: i32) -> (i32, i32) {
    %c0_i32 = arith.constant 0 : i32
    %c0_i32_0 = arith.constant 0 : i32
    %c0_i32_1 = arith.constant 0 : i32
    return %c0_i32, %c0_i32_0 : i32, i32
  }
  func.func @transform_5(%arg0: i32) -> (i32, i32) {
    %c0_i32 = arith.constant 0 : i32
    %c0_i32_0 = arith.constant 0 : i32
    %c0_i32_1 = arith.constant 0 : i32
    return %c0_i32, %c0_i32_0 : i32, i32
  }
  func.func @transform_6(%arg0: i32) -> (i32, i32) {
    %c0_i32 = arith.constant 0 : i32
    %c0_i32_0 = arith.constant 0 : i32
    %c0_i32_1 = arith.constant 0 : i32
    return %c0_i32, %c0_i32_0 : i32, i32
  }
  func.func @transform_7(%arg0: i32) -> (i32, i32) {
    %c0_i32 = arith.constant 0 : i32
    %c0_i32_0 = arith.constant 0 : i32
    return %c0_i32, %arg0 : i32, i32
  }
}

</mosaic_0001>

<llo_original>
// kernel: qnetwork_forward.1
$region0: #{qnetwork_forward.1}
  #allocation0 [shape = 'u32[]', space=smem, size = 0x4, offset = 0x4, fixed_abs, tag = 'smem constant byte address 0x4 - core index']
  #allocation1 [shape = 'u32[72,128]{1,0:T(1,128)}', space=vmem, size = 0x9000, scoped, tag = 'internal scratch']
  %s0 = inlined_call_operand.vmem [shape: f32[8,8], index: 0, kind: input, shape index: {}]
  %s1 = inlined_call_operand.vmem [shape: f32[128,8], index: 1, kind: input, shape index: {}]
  %s2 = inlined_call_operand.vmem [shape: f32[128,1], index: 2, kind: input, shape index: {}]
  %s3 = inlined_call_operand.vmem [shape: f32[128,128], index: 3, kind: input, shape index: {}]
  %s4 = inlined_call_operand.vmem [shape: f32[128,1], index: 4, kind: input, shape index: {}]
  %s5 = inlined_call_operand.vmem [shape: f32[8,128], index: 5, kind: input, shape index: {}]
  %s6 = inlined_call_operand.vmem [shape: f32[8,1], index: 6, kind: input, shape index: {}]
  %s7 = inlined_call_operand.vmem [shape: f32[8,8], index: 7, kind: output, shape index: {}]
  %s8 = sld [smem:[#allocation0]]
  $region38: #{qnetwork_forward.1} parent=0
    _
  %s10 = ssub.s32 1, %s8
  %s11 = scalar_select 0, %s10, %s8
  // Predicated region
  $region2: #{qnetwork_forward.1} parent=0 // pred_check
    _
  $region3: #{qnetwork_forward.1} parent=0 // pred_check_branch
    %13 = sbr.rel (0) target = $region5
  $region4: #{qnetwork_forward.1} parent=0 // pred_region
    _
  $region5: #{qnetwork_forward.1} parent=0 // pred_fallthru
    _
  // Predicated region
  $region6: #{qnetwork_forward.1} parent=0 // pred_check
    _
  $region7: #{qnetwork_forward.1} parent=0 // pred_check_branch
    %15 = sbr.rel (0) target = $region9
  $region8: #{qnetwork_forward.1} parent=0 // pred_region
    _
  $region9: #{qnetwork_forward.1} parent=0 // pred_fallthru
    _
  // Predicated region
  $region10: #{qnetwork_forward.1} parent=0 // pred_check
    _
  $region11: #{qnetwork_forward.1} parent=0 // pred_check_branch
    %17 = sbr.rel (0) target = $region13
  $region12: #{qnetwork_forward.1} parent=0 // pred_region
    _
  $region13: #{qnetwork_forward.1} parent=0 // pred_fallthru
    _
  // Predicated region
  $region14: #{qnetwork_forward.1} parent=0 // pred_check
    _
  $region15: #{qnetwork_forward.1} parent=0 // pred_check_branch
    %19 = sbr.rel (0) target = $region17
  $region16: #{qnetwork_forward.1} parent=0 // pred_region
    _
  $region17: #{qnetwork_forward.1} parent=0 // pred_fallthru
    _
  // Predicated region
  $region18: #{qnetwork_forward.1} parent=0 // pred_check
    _
  $region19: #{qnetwork_forward.1} parent=0 // pred_check_branch
    %21 = sbr.rel (0) target = $region21
  $region20: #{qnetwork_forward.1} parent=0 // pred_region
    _
  $region21: #{qnetwork_forward.1} parent=0 // pred_fallthru
    _
  // Predicated region
  $region22: #{qnetwork_forward.1} parent=0 // pred_check
    _
  $region23: #{qnetwork_forward.1} parent=0 // pred_check_branch
    %23 = sbr.rel (0) target = $region25
  $region24: #{qnetwork_forward.1} parent=0 // pred_region
    _
  $region25: #{qnetwork_forward.1} parent=0 // pred_fallthru
    _
  // Predicated region
  $region26: #{qnetwork_forward.1} parent=0 // pred_check
    _
  $region27: #{qnetwork_forward.1} parent=0 // pred_check_branch
    %25 = sbr.rel (0) target = $region29
  $region28: #{qnetwork_forward.1} parent=0 // pred_region
    _
  $region29: #{qnetwork_forward.1} parent=0 // pred_fallthru
    _
  %v26 = vld [vmem:[%s1] sm:$0xff]
  %v27 = vld [vmem:[%s1 + $0x8] sm:$0xff]
  %v28 = vld [vmem:[%s1 + $0x10] sm:$0xff]
  %v29 = vld [vmem:[%s1 + $0x18] sm:$0xff]
  %v30 = vld [vmem:[%s1 + $0x20] sm:$0xff]
  %v31 = vld [vmem:[%s1 + $0x28] sm:$0xff]
  %v32 = vld [vmem:[%s1 + $0x30] sm:$0xff]
  %v33 = vld [vmem:[%s1 + $0x38] sm:$0xff]
  %v34 = vld [vmem:[%s1 + $0x40] sm:$0xff]
  %v35 = vld [vmem:[%s1 + $0x48] sm:$0xff]
  %v36 = vld [vmem:[%s1 + $0x50] sm:$0xff]
  %v37 = vld [vmem:[%s1 + $0x58] sm:$0xff]
  %v38 = vld [vmem:[%s1 + $0x60] sm:$0xff]
  %v39 = vld [vmem:[%s1 + $0x68] sm:$0xff]
  %v40 = vld [vmem:[%s1 + $0x70] sm:$0xff]
  %v41 = vld [vmem:[%s1 + $0x78] sm:$0xff]
  %v42 = vld [vmem:[%s0] sm:$0x1]
  %44 = vset.pattern.permute.xlu0 0
  %45 = vperm.xlu0 %44, %v26
  %v46 = vpop.permute.xlu0 %45
  %49 = vset.pattern.permute.xlu0 0
  %50 = vperm.xlu0 %49, %v27
  %v51 = vpop.permute.xlu0 %50
  %54 = vset.pattern.permute.xlu0 0
  %55 = vperm.xlu0 %54, %v28
  %v56 = vpop.permute.xlu0 %55
  %59 = vset.pattern.permute.xlu0 0
  %60 = vperm.xlu0 %59, %v29
  %v61 = vpop.permute.xlu0 %60
  %64 = vset.pattern.permute.xlu0 0
  %65 = vperm.xlu0 %64, %v30
  %v66 = vpop.permute.xlu0 %65
  %69 = vset.pattern.permute.xlu0 0
  %70 = vperm.xlu0 %69, %v31
  %v71 = vpop.permute.xlu0 %70
  %74 = vset.pattern.permute.xlu0 0
  %75 = vperm.xlu0 %74, %v32
  %v76 = vpop.permute.xlu0 %75
  %79 = vset.pattern.permute.xlu0 0
  %80 = vperm.xlu0 %79, %v33
  %v81 = vpop.permute.xlu0 %80
  %84 = vset.pattern.permute.xlu0 0
  %85 = vperm.xlu0 %84, %v34
  %v86 = vpop.permute.xlu0 %85
  %89 = vset.pattern.permute.xlu0 0
  %90 = vperm.xlu0 %89, %v35
  %v91 = vpop.permute.xlu0 %90
  %94 = vset.pattern.permute.xlu0 0
  %95 = vperm.xlu0 %94, %v36
  %v96 = vpop.permute.xlu0 %95
  %99 = vset.pattern.permute.xlu0 0
  %100 = vperm.xlu0 %99, %v37
  %v101 = vpop.permute.xlu0 %100
  %104 = vset.pattern.permute.xlu0 0
  %105 = vperm.xlu0 %104, %v38
  %v106 = vpop.permute.xlu0 %105
  %109 = vset.pattern.permute.xlu0 0
  %110 = vperm.xlu0 %109, %v39
  %v111 = vpop.permute.xlu0 %110
  %114 = vset.pattern.permute.xlu0 0
  %115 = vperm.xlu0 %114, %v40
  %v116 = vpop.permute.xlu0 %115
  %119 = vset.pattern.permute.xlu0 0
  %120 = vperm.xlu0 %119, %v41
  %v121 = vpop.permute.xlu0 %120
  %v123 = vperm.slane %v42, 0
  %v124 = vmul.f32 %v46, %v123
  %v125 = vmul.f32 %v51, %v123
  %v126 = vmul.f32 %v56, %v123
  %v127 = vmul.f32 %v61, %v123
  %v128 = vmul.f32 %v66, %v123
  %v129 = vmul.f32 %v71, %v123
  %v130 = vmul.f32 %v76, %v123
  %v131 = vmul.f32 %v81, %v123
  %v132 = vmul.f32 %v86, %v123
  %v133 = vmul.f32 %v91, %v123
  %v134 = vmul.f32 %v96, %v123
  %v135 = vmul.f32 %v101, %v123
  %v136 = vmul.f32 %v106, %v123
  %v137 = vmul.f32 %v111, %v123
  %v138 = vmul.f32 %v116, %v123
  %v139 = vmul.f32 %v121, %v123
  %v140 = vld [vmem:[%s0 + $0x1] sm:$0x1]
  %141 = vset.pattern.permute.xlu0 1
  %142 = vperm.xlu0 %141, %v26
  %v143 = vpop.permute.xlu0 %142
  %145 = vset.pattern.permute.xlu0 1
  %146 = vperm.xlu0 %145, %v27
  %v147 = vpop.permute.xlu0 %146
  %149 = vset.pattern.permute.xlu0 1
  %150 = vperm.xlu0 %149, %v28
  %v151 = vpop.permute.xlu0 %150
  %153 = vset.pattern.permute.xlu0 1
  %154 = vperm.xlu0 %153, %v29
  %v155 = vpop.permute.xlu0 %154
  %157 = vset.pattern.permute.xlu0 1
  %158 = vperm.xlu0 %157, %v30
  %v159 = vpop.permute.xlu0 %158
  %161 = vset.pattern.permute.xlu0 1
  %162 = vperm.xlu0 %161, %v31
  %v163 = vpop.permute.xlu0 %162
  %165 = vset.pattern.permute.xlu0 1
  %166 = vperm.xlu0 %165, %v32
  %v167 = vpop.permute.xlu0 %166
  %169 = vset.pattern.permute.xlu0 1
  %170 = vperm.xlu0 %169, %v33
  %v171 = vpop.permute.xlu0 %170
  %173 = vset.pattern.permute.xlu0 1
  %174 = vperm.xlu0 %173, %v34
  %v175 = vpop.permute.xlu0 %174
  %177 = vset.pattern.permute.xlu0 1
  %178 = vperm.xlu0 %177, %v35
  %v179 = vpop.permute.xlu0 %178
  %181 = vset.pattern.permute.xlu0 1
  %182 = vperm.xlu0 %181, %v36
  %v183 = vpop.permute.xlu0 %182
  %185 = vset.pattern.permute.xlu0 1
  %186 = vperm.xlu0 %185, %v37
  %v187 = vpop.permute.xlu0 %186
  %189 = vset.pattern.permute.xlu0 1
  %190 = vperm.xlu0 %189, %v38
  %v191 = vpop.permute.xlu0 %190
  %193 = vset.pattern.permute.xlu0 1
  %194 = vperm.xlu0 %193, %v39
  %v195 = vpop.permute.xlu0 %194
  %197 = vset.pattern.permute.xlu0 1
  %198 = vperm.xlu0 %197, %v40
  %v199 = vpop.permute.xlu0 %198
  %201 = vset.pattern.permute.xlu0 1
  %202 = vperm.xlu0 %201, %v41
  %v203 = vpop.permute.xlu0 %202
  %v205 = vperm.slane %v140, 0
  %v206 = vmul.f32 %v143, %v205
  %v207 = vmul.f32 %v147, %v205
  %v208 = vmul.f32 %v151, %v205
  %v209 = vmul.f32 %v155, %v205
  %v210 = vmul.f32 %v159, %v205
  %v211 = vmul.f32 %v163, %v205
  %v212 = vmul.f32 %v167, %v205
  %v213 = vmul.f32 %v171, %v205
  %v214 = vmul.f32 %v175, %v205
  %v215 = vmul.f32 %v179, %v205
  %v216 = vmul.f32 %v183, %v205
  %v217 = vmul.f32 %v187, %v205
  %v218 = vmul.f32 %v191, %v205
  %v219 = vmul.f32 %v195, %v205
  %v220 = vmul.f32 %v199, %v205
  %v221 = vmul.f32 %v203, %v205
  %v222 = vadd.f32 %v124, %v206
  %v223 = vadd.f32 %v125, %v207
  %v224 = vadd.f32 %v126, %v208
  %v225 = vadd.f32 %v127, %v209
  %v226 = vadd.f32 %v128, %v210
  %v227 = vadd.f32 %v129, %v211
  %v228 = vadd.f32 %v130, %v212
  %v229 = vadd.f32 %v131, %v213
  %v230 = vadd.f32 %v132, %v214
  %v231 = vadd.f32 %v133, %v215
  %v232 = vadd.f32 %v134, %v216
  %v233 = vadd.f32 %v135, %v217
  %v234 = vadd.f32 %v136, %v218
  %v235 = vadd.f32 %v137, %v219
  %v236 = vadd.f32 %v138, %v220
  %v237 = vadd.f32 %v139, %v221
  %v238 = vld [vmem:[%s2] sm:$0xff]
  %v239 = vld [vmem:[%s2 + $0x8] sm:$0xff]
  %v240 = vld [vmem:[%s2 + $0x10] sm:$0xff]
  %v241 = vld [vmem:[%s2 + $0x18] sm:$0xff]
  %v242 = vld [vmem:[%s2 + $0x20] sm:$0xff]
  %v243 = vld [vmem:[%s2 + $0x28] sm:$0xff]
  %v244 = vld [vmem:[%s2 + $0x30] sm:$0xff]
  %v245 = vld [vmem:[%s2 + $0x38] sm:$0xff]
  %v246 = vld [vmem:[%s2 + $0x40] sm:$0xff]
  %v247 = vld [vmem:[%s2 + $0x48] sm:$0xff]
  %v248 = vld [vmem:[%s2 + $0x50] sm:$0xff]
  %v249 = vld [vmem:[%s2 + $0x58] sm:$0xff]
  %v250 = vld [vmem:[%s2 + $0x60] sm:$0xff]
  %v251 = vld [vmem:[%s2 + $0x68] sm:$0xff]
  %v252 = vld [vmem:[%s2 + $0x70] sm:$0xff]
  %v253 = vld [vmem:[%s2 + $0x78] sm:$0xff]
  %255 = vset.pattern.permute.xlu0 0
  %256 = vperm.xlu0 %255, %v238
  %v257 = vpop.permute.xlu0 %256
  %260 = vset.pattern.permute.xlu0 0
  %261 = vperm.xlu0 %260, %v239
  %v262 = vpop.permute.xlu0 %261
  %265 = vset.pattern.permute.xlu0 0
  %266 = vperm.xlu0 %265, %v240
  %v267 = vpop.permute.xlu0 %266
  %270 = vset.pattern.permute.xlu0 0
  %271 = vperm.xlu0 %270, %v241
  %v272 = vpop.permute.xlu0 %271
  %275 = vset.pattern.permute.xlu0 0
  %276 = vperm.xlu0 %275, %v242
  %v277 = vpop.permute.xlu0 %276
  %280 = vset.pattern.permute.xlu0 0
  %281 = vperm.xlu0 %280, %v243
  %v282 = vpop.permute.xlu0 %281
  %285 = vset.pattern.permute.xlu0 0
  %286 = vperm.xlu0 %285, %v244
  %v287 = vpop.permute.xlu0 %286
  %290 = vset.pattern.permute.xlu0 0
  %291 = vperm.xlu0 %290, %v245
  %v292 = vpop.permute.xlu0 %291
  %295 = vset.pattern.permute.xlu0 0
  %296 = vperm.xlu0 %295, %v246
  %v297 = vpop.permute.xlu0 %296
  %300 = vset.pattern.permute.xlu0 0
  %301 = vperm.xlu0 %300, %v247
  %v302 = vpop.permute.xlu0 %301
  %305 = vset.pattern.permute.xlu0 0
  %306 = vperm.xlu0 %305, %v248
  %v307 = vpop.permute.xlu0 %306
  %310 = vset.pattern.permute.xlu0 0
  %311 = vperm.xlu0 %310, %v249
  %v312 = vpop.permute.xlu0 %311
  %315 = vset.pattern.permute.xlu0 0
  %316 = vperm.xlu0 %315, %v250
  %v317 = vpop.permute.xlu0 %316
  %320 = vset.pattern.permute.xlu0 0
  %321 = vperm.xlu0 %320, %v251
  %v322 = vpop.permute.xlu0 %321
  %325 = vset.pattern.permute.xlu0 0
  %326 = vperm.xlu0 %325, %v252
  %v327 = vpop.permute.xlu0 %326
  %330 = vset.pattern.permute.xlu0 0
  %331 = vperm.xlu0 %330, %v253
  %v332 = vpop.permute.xlu0 %331
  %v334 = vadd.f32 %v222, %v257
  %v335 = vadd.f32 %v223, %v262
  %v336 = vadd.f32 %v224, %v267
  %v337 = vadd.f32 %v225, %v272
  %v338 = vadd.f32 %v226, %v277
  %v339 = vadd.f32 %v227, %v282
  %v340 = vadd.f32 %v228, %v287
  %v341 = vadd.f32 %v229, %v292
  %v342 = vadd.f32 %v230, %v297
  %v343 = vadd.f32 %v231, %v302
  %v344 = vadd.f32 %v232, %v307
  %v345 = vadd.f32 %v233, %v312
  %v346 = vadd.f32 %v234, %v317
  %v347 = vadd.f32 %v235, %v322
  %v348 = vadd.f32 %v236, %v327
  %v349 = vadd.f32 %v237, %v332
  %v350 = vmax.f32 %v334, 0.0
  %v351 = vmax.f32 %v335, 0.0
  %v352 = vmax.f32 %v336, 0.0
  %v353 = vmax.f32 %v337, 0.0
  %v354 = vmax.f32 %v338, 0.0
  %v355 = vmax.f32 %v339, 0.0
  %v356 = vmax.f32 %v340, 0.0
  %v357 = vmax.f32 %v341, 0.0
  %v358 = vmax.f32 %v342, 0.0
  %v359 = vmax.f32 %v343, 0.0
  %v360 = vmax.f32 %v344, 0.0
  %v361 = vmax.f32 %v345, 0.0
  %v362 = vmax.f32 %v346, 0.0
  %v363 = vmax.f32 %v347, 0.0
  %v364 = vmax.f32 %v348, 0.0
  %v365 = vmax.f32 %v349, 0.0
  %v366 = vld [vmem:[%s3] sm:$0xff]
  %v367 = vld [vmem:[%s3 + $0x8] sm:$0xff]
  %v368 = vld [vmem:[%s3 + $0x10] sm:$0xff]
  %v369 = vld [vmem:[%s3 + $0x18] sm:$0xff]
  %v370 = vld [vmem:[%s3 + $0x20] sm:$0xff]
  %v371 = vld [vmem:[%s3 + $0x28] sm:$0xff]
  %v372 = vld [vmem:[%s3 + $0x30] sm:$0xff]
  %v373 = vld [vmem:[%s3 + $0x38] sm:$0xff]
  %v374 = vld [vmem:[%s3 + $0x40] sm:$0xff]
  %v375 = vld [vmem:[%s3 + $0x48] sm:$0xff]
  %v376 = vld [vmem:[%s3 + $0x50] sm:$0xff]
  %v377 = vld [vmem:[%s3 + $0x58] sm:$0xff]
  %v378 = vld [vmem:[%s3 + $0x60] sm:$0xff]
  %v379 = vld [vmem:[%s3 + $0x68] sm:$0xff]
  %v380 = vld [vmem:[%s3 + $0x70] sm:$0xff]
  %v381 = vld [vmem:[%s3 + $0x78] sm:$0xff]
  %v382 = vld [vmem:[%s4] sm:$0xff]
  %v383 = vld [vmem:[%s4 + $0x8] sm:$0xff]
  %v384 = vld [vmem:[%s4 + $0x10] sm:$0xff]
  %v385 = vld [vmem:[%s4 + $0x18] sm:$0xff]
  %v386 = vld [vmem:[%s4 + $0x20] sm:$0xff]
  %v387 = vld [vmem:[%s4 + $0x28] sm:$0xff]
  %v388 = vld [vmem:[%s4 + $0x30] sm:$0xff]
  %v389 = vld [vmem:[%s4 + $0x38] sm:$0xff]
  %v390 = vld [vmem:[%s4 + $0x40] sm:$0xff]
  %v391 = vld [vmem:[%s4 + $0x48] sm:$0xff]
  %v392 = vld [vmem:[%s4 + $0x50] sm:$0xff]
  %v393 = vld [vmem:[%s4 + $0x58] sm:$0xff]
  %v394 = vld [vmem:[%s4 + $0x60] sm:$0xff]
  %v395 = vld [vmem:[%s4 + $0x68] sm:$0xff]
  %v396 = vld [vmem:[%s4 + $0x70] sm:$0xff]
  %v397 = vld [vmem:[%s4 + $0x78] sm:$0xff]
  %399 = vset.pattern.permute.xlu0 0
  %400 = vperm.xlu0 %399, %v382
  %v401 = vpop.permute.xlu0 %400
  %404 = vset.pattern.permute.xlu0 0
  %405 = vperm.xlu0 %404, %v383
  %v406 = vpop.permute.xlu0 %405
  %409 = vset.pattern.permute.xlu0 0
  %410 = vperm.xlu0 %409, %v384
  %v411 = vpop.permute.xlu0 %410
  %414 = vset.pattern.permute.xlu0 0
  %415 = vperm.xlu0 %414, %v385
  %v416 = vpop.permute.xlu0 %415
  %419 = vset.pattern.permute.xlu0 0
  %420 = vperm.xlu0 %419, %v386
  %v421 = vpop.permute.xlu0 %420
  %424 = vset.pattern.permute.xlu0 0
  %425 = vperm.xlu0 %424, %v387
  %v426 = vpop.permute.xlu0 %425
  %429 = vset.pattern.permute.xlu0 0
  %430 = vperm.xlu0 %429, %v388
  %v431 = vpop.permute.xlu0 %430
  %434 = vset.pattern.permute.xlu0 0
  %435 = vperm.xlu0 %434, %v389
  %v436 = vpop.permute.xlu0 %435
  %439 = vset.pattern.permute.xlu0 0
  %440 = vperm.xlu0 %439, %v390
  %v441 = vpop.permute.xlu0 %440
  %444 = vset.pattern.permute.xlu0 0
  %445 = vperm.xlu0 %444, %v391
  %v446 = vpop.permute.xlu0 %445
  %449 = vset.pattern.permute.xlu0 0
  %450 = vperm.xlu0 %449, %v392
  %v451 = vpop.permute.xlu0 %450
  %454 = vset.pattern.permute.xlu0 0
  %455 = vperm.xlu0 %454, %v393
  %v456 = vpop.permute.xlu0 %455
  %459 = vset.pattern.permute.xlu0 0
  %460 = vperm.xlu0 %459, %v394
  %v461 = vpop.permute.xlu0 %460
  %464 = vset.pattern.permute.xlu0 0
  %465 = vperm.xlu0 %464, %v395
  %v466 = vpop.permute.xlu0 %465
  %469 = vset.pattern.permute.xlu0 0
  %470 = vperm.xlu0 %469, %v396
  %v471 = vpop.permute.xlu0 %470
  %474 = vset.pattern.permute.xlu0 0
  %475 = vperm.xlu0 %474, %v397
  %v476 = vpop.permute.xlu0 %475
  %478 = vmatpush.msra.mxu0 %v365
  %479 = vmatpush.msra.mxu0 %v364
  %480 = vmatpush.msra.mxu0 %v363
  %481 = vmatpush.msra.mxu0 %v362
  %482 = vmatpush.msra.mxu0 %v361
  %483 = vmatpush.msra.mxu0 %v360
  %484 = vmatpush.msra.mxu0 %v359
  %485 = vmatpush.msra.mxu0 %v358
  %486 = vmatpush.msra.mxu0 %v357
  %487 = vmatpush.msra.mxu0 %v356
  %488 = vmatpush.msra.mxu0 %v355
  %489 = vmatpush.msra.mxu0 %v354
  %490 = vmatpush.msra.mxu0 %v353
  %491 = vmatpush.msra.mxu0 %v352
  %492 = vmatpush.msra.mxu0 %v351
  %493 = vmatpush.msra.mxu0 %v350
  %494 = vmatmul.f32.gmra.mxu0 %v366
  %v495 = vpop.f32.mrf.mxu0
  %v496 = vadd.f32 %v401, %v495
  %497 = vmatmul.f32.gmra.mxu0 %v367
  %v498 = vpop.f32.mrf.mxu0
  %v499 = vadd.f32 %v406, %v498
  %500 = vmatmul.f32.gmra.mxu0 %v368
  %v501 = vpop.f32.mrf.mxu0
  %v502 = vadd.f32 %v411, %v501
  %503 = vmatmul.f32.gmra.mxu0 %v369
  %v504 = vpop.f32.mrf.mxu0
  %v505 = vadd.f32 %v416, %v504
  %506 = vmatmul.f32.gmra.mxu0 %v370
  %v507 = vpop.f32.mrf.mxu0
  %v508 = vadd.f32 %v421, %v507
  %509 = vmatmul.f32.gmra.mxu0 %v371
  %v510 = vpop.f32.mrf.mxu0
  %v511 = vadd.f32 %v426, %v510
  %512 = vmatmul.f32.gmra.mxu0 %v372
  %v513 = vpop.f32.mrf.mxu0
  %v514 = vadd.f32 %v431, %v513
  %515 = vmatmul.f32.gmra.mxu0 %v373
  %v516 = vpop.f32.mrf.mxu0
  %v517 = vadd.f32 %v436, %v516
  %518 = vmatmul.f32.gmra.mxu0 %v374
  %v519 = vpop.f32.mrf.mxu0
  %v520 = vadd.f32 %v441, %v519
  %521 = vmatmul.f32.gmra.mxu0 %v375
  %v522 = vpop.f32.mrf.mxu0
  %v523 = vadd.f32 %v446, %v522
  %524 = vmatmul.f32.gmra.mxu0 %v376
  %v525 = vpop.f32.mrf.mxu0
  %v526 = vadd.f32 %v451, %v525
  %527 = vmatmul.f32.gmra.mxu0 %v377
  %v528 = vpop.f32.mrf.mxu0
  %v529 = vadd.f32 %v456, %v528
  %530 = vmatmul.f32.gmra.mxu0 %v378
  %v531 = vpop.f32.mrf.mxu0
  %v532 = vadd.f32 %v461, %v531
  %533 = vmatmul.f32.gmra.mxu0 %v379
  %v534 = vpop.f32.mrf.mxu0
  %v535 = vadd.f32 %v466, %v534
  %536 = vmatmul.f32.gmra.mxu0 %v380
  %v537 = vpop.f32.mrf.mxu0
  %v538 = vadd.f32 %v471, %v537
  %539 = vmatmul.f32.gmra.mxu0 %v381
  %v540 = vpop.f32.mrf.mxu0
  %v541 = vadd.f32 %v476, %v540
  %542 = vdwg.mxu0
  %v543 = vmax.f32 %v496, 0.0
  %v544 = vmax.f32 %v499, 0.0
  %v545 = vmax.f32 %v502, 0.0
  %v546 = vmax.f32 %v505, 0.0
  %v547 = vmax.f32 %v508, 0.0
  %v548 = vmax.f32 %v511, 0.0
  %v549 = vmax.f32 %v514, 0.0
  %v550 = vmax.f32 %v517, 0.0
  %v551 = vmax.f32 %v520, 0.0
  %v552 = vmax.f32 %v523, 0.0
  %v553 = vmax.f32 %v526, 0.0
  %v554 = vmax.f32 %v529, 0.0
  %v555 = vmax.f32 %v532, 0.0
  %v556 = vmax.f32 %v535, 0.0
  %v557 = vmax.f32 %v538, 0.0
  %v558 = vmax.f32 %v541, 0.0
  %v559 = vld [vmem:[%s5] sm:$0xff]
  %v560 = vld [vmem:[%s6] sm:$0xff]
  %562 = vset.pattern.permute.xlu0 0
  %563 = vperm.xlu0 %562, %v560
  %v564 = vpop.permute.xlu0 %563
  %566 = vmatpush.msra.mxu0 %v558
  %567 = vmatpush.msra.mxu0 %v557
  %568 = vmatpush.msra.mxu0 %v556
  %569 = vmatpush.msra.mxu0 %v555
  %570 = vmatpush.msra.mxu0 %v554
  %571 = vmatpush.msra.mxu0 %v553
  %572 = vmatpush.msra.mxu0 %v552
  %573 = vmatpush.msra.mxu0 %v551
  %574 = vmatpush.msra.mxu0 %v550
  %575 = vmatpush.msra.mxu0 %v549
  %576 = vmatpush.msra.mxu0 %v548
  %577 = vmatpush.msra.mxu0 %v547
  %578 = vmatpush.msra.mxu0 %v546
  %579 = vmatpush.msra.mxu0 %v545
  %580 = vmatpush.msra.mxu0 %v544
  %581 = vmatpush.msra.mxu0 %v543
  %582 = vmatmul.f32.gmra.mxu0 %v559
  %v583 = vpop.f32.mrf.mxu0
  %v584 = vadd.f32 %v564, %v583
  %585 = vdwg.mxu0
  %vm586 = vcmask 64512
  %587 = vst.msk [vmem:[%s7] sm:$0xff] %vm586, %v584
  // Predicated region
  $region30: #{qnetwork_forward.1} parent=0 // pred_check
    _
  $region31: #{qnetwork_forward.1} parent=0 // pred_check_branch
    %589 = sbr.rel (0) target = $region33
  $region32: #{qnetwork_forward.1} parent=0 // pred_region
    _
  $region33: #{qnetwork_forward.1} parent=0 // pred_fallthru
    _
  // Predicated region
  $region34: #{qnetwork_forward.1} parent=0 // pred_check
    _
  $region35: #{qnetwork_forward.1} parent=0 // pred_check_branch
    %591 = sbr.rel (0) target = $region37
  $region36: #{qnetwork_forward.1} parent=0 // pred_region
    _
  $region37: #{qnetwork_forward.1} parent=0 // pred_fallthru
    _

</llo_original>
